<compile_context>
chip_gen: v5e
topology: v5e:2x2
jax: 0.10.0
libtpu: 0.0.40
codegen_flags: <defaults>
</compile_context>

<pallas_src>
import functools

import jax
import jax.numpy as jnp
from jax.experimental import pallas as pl
from jax.experimental.pallas import tpu as pltpu

_SUBLANES = 8
_LANES = 128


def _kto_kernel(pc_ref, pr_ref, rc_ref, rr_ref,
                loss_ref, cr_ref, rj_ref, *, beta, inv_b, valid_b, padded):
    # Load in native dtype, upcast to f32 in-register (cheap VPU cast, halves HBM
    # traffic for bf16 inputs).
    pc = pc_ref[...].astype(jnp.float32)   # (8, C) policy_chosen_logps
    pr = pr_ref[...].astype(jnp.float32)   # (8, C) policy_rejected_logps
    rc = rc_ref[...].astype(jnp.float32)   # (8, C) reference_chosen_logps
    rr = rr_ref[...].astype(jnp.float32)   # (8, C) reference_rejected_logps

    chosen_lr = pc - rc                    # chosen_logratios
    rejected_lr = pr - rr                  # rejected_logratios

    # KL estimates: batch mean, clamped at 0.  Padded entries are exact zeros in
    # both operands, so they contribute nothing to the sums; divide by true B.
    chosen_kl = jnp.maximum(jnp.sum(chosen_lr) * inv_b, 0.0)
    rejected_kl = jnp.maximum(jnp.sum(rejected_lr) * inv_b, 0.0)

    # Rewards computed once and reused in the tanh arguments (saves two vmuls).
    cr = beta * chosen_lr                  # chosen_rewards
    rj = beta * rejected_lr                # rejected_rewards

    # 1 - sigmoid(x) == 0.5 * (1 - tanh(x / 2)); tanh runs on the EUP slot.
    l_chosen = 0.5 * (1.0 - jnp.tanh(0.5 * (cr - beta * rejected_kl)))
    l_rejected = 0.5 * (1.0 - jnp.tanh(0.5 * (beta * chosen_kl - rj)))

    if padded:
        rows, cols = cr.shape
        row = jax.lax.broadcasted_iota(jnp.int32, (rows, cols), 0)
        col = jax.lax.broadcasted_iota(jnp.int32, (rows, cols), 1)
        valid = (row * cols + col) < valid_b
        l_chosen = jnp.where(valid, l_chosen, 0.0)
        l_rejected = jnp.where(valid, l_rejected, 0.0)

    # mean over the concatenated (2B,) vector == (sum1 + sum2) / (2B).  Scalar
    # result goes straight to SMEM (no masked VMEM partial store).
    loss_ref[0, 0] = (jnp.sum(l_chosen) + jnp.sum(l_rejected)) * (0.5 * inv_b)

    cr_ref[...] = cr.astype(cr_ref.dtype)
    rj_ref[...] = rj.astype(rj_ref.dtype)


def vanilla_kto_loss(policy_chosen_logps, policy_rejected_logps,
                     reference_chosen_logps, reference_rejected_logps, *, beta):
    """Pallas implementation of openrlhf VanillaKTOLoss.forward.

    Returns (loss [scalar f32], chosen_rewards (B,), rejected_rewards (B,)).
    Rewards are returned in the input dtype.
    """
    (B,) = policy_chosen_logps.shape
    dtype = policy_chosen_logps.dtype

    # Sublane/lane-dense packing: pad B up to a multiple of 8*128 and lay out as
    # (8, Bp//8).  The pad is a few KiB at most; the mask in-kernel handles it.
    tile = _SUBLANES * _LANES
    Bp = ((B + tile - 1) // tile) * tile
    pad = Bp - B
    cols = Bp // _SUBLANES

    def prep(a):
        if pad:
            a = jnp.pad(a, (0, pad))
        return a.reshape(_SUBLANES, cols)

    args = [prep(a) for a in (policy_chosen_logps, policy_rejected_logps,
                              reference_chosen_logps, reference_rejected_logps)]

    kernel = functools.partial(_kto_kernel, beta=float(beta), inv_b=1.0 / B,
                               valid_b=B, padded=bool(pad))

    vec_spec = pl.BlockSpec((_SUBLANES, cols), lambda: (0, 0))
    itemsize = jnp.dtype(dtype).itemsize
    cost = pl.CostEstimate(flops=16 * B, transcendentals=2 * B,
                           bytes_accessed=6 * B * itemsize + 4)

    loss, chosen_rewards, rejected_rewards = pl.pallas_call(
        kernel,
        out_shape=(jax.ShapeDtypeStruct((1, 1), jnp.float32),
                   jax.ShapeDtypeStruct((_SUBLANES, cols), dtype),
                   jax.ShapeDtypeStruct((_SUBLANES, cols), dtype)),
        in_specs=[vec_spec] * 4,
        out_specs=(pl.BlockSpec(memory_space=pltpu.MemorySpace.SMEM),
                   vec_spec, vec_spec),
        cost_estimate=cost,
    )(*args)

    return (loss[0, 0],
            chosen_rewards.reshape(Bp)[:B],
            rejected_rewards.reshape(Bp)[:B])


def _kto_ref(pc, pr, rc, rr, beta):
    """Pure-JAX reference mirroring the PyTorch module."""
    pc, pr, rc, rr = (x.astype(jnp.float32) for x in (pc, pr, rc, rr))
    chosen_kl = jnp.maximum((pc - rc).mean(), 0.0)
    rejected_kl = jnp.maximum((pr - rr).mean(), 0.0)
    chosen_lr = pc - rc
    rejected_lr = pr - rr
    losses = jnp.concatenate(
        [1.0 - jax.nn.sigmoid(beta * (chosen_lr - rejected_kl)),
         1.0 - jax.nn.sigmoid(beta * (chosen_kl - rejected_lr))],
        axis=0).mean()
    return losses, beta * chosen_lr, beta * rejected_lr


if __name__ == "__main__":
    key = jax.random.PRNGKey(0)
    beta = 0.1

    # --- small batch (exercises the padded/masked path), f32 -----------------
    B = 8
    k1, k2, k3, k4, k5 = jax.random.split(key, 5)
    pc = jax.random.normal(k1, (B,), jnp.float32)
    pr = jax.random.normal(k2, (B,), jnp.float32)
    rc = jax.random.normal(k3, (B,), jnp.float32)
    rr = jax.random.normal(k4, (B,), jnp.float32)

    loss, c_rew, r_rew = vanilla_kto_loss(pc, pr, rc, rr, beta=beta)
    jax.block_until_ready((loss, c_rew, r_rew))
    loss_ref, c_ref, r_ref = _kto_ref(pc, pr, rc, rr, beta)
    assert jnp.allclose(loss, loss_ref, atol=1e-5), (loss, loss_ref)
    assert jnp.allclose(c_rew, c_ref, atol=1e-5)
    assert jnp.allclose(r_rew, r_ref, atol=1e-5)

    # --- bf16 inputs (native-dtype load, in-register upcast) -----------------
    pc_b, pr_b, rc_b, rr_b = (x.astype(jnp.bfloat16) for x in (pc, pr, rc, rr))
    loss_b, c_b, r_b = vanilla_kto_loss(pc_b, pr_b, rc_b, rr_b, beta=beta)
    jax.block_until_ready((loss_b, c_b, r_b))
    loss_rb, c_rb, r_rb = _kto_ref(pc_b, pr_b, rc_b, rr_b, beta)
    assert jnp.allclose(loss_b, loss_rb, atol=1e-5), (loss_b, loss_rb)
    assert jnp.allclose(c_b.astype(jnp.float32), c_rb, atol=1e-2)
    assert jnp.allclose(r_b.astype(jnp.float32), r_rb, atol=1e-2)

    # --- B multiple of 8*128 (exercises the unpadded / unmasked path) --------
    B2 = 1024
    ka, kb, kc, kd = jax.random.split(k5, 4)
    pc2 = jax.random.normal(ka, (B2,), jnp.float32)
    pr2 = jax.random.normal(kb, (B2,), jnp.float32)
    rc2 = jax.random.normal(kc, (B2,), jnp.float32)
    rr2 = jax.random.normal(kd, (B2,), jnp.float32)
    loss2, c2, r2 = vanilla_kto_loss(pc2, pr2, rc2, rr2, beta=beta)
    jax.block_until_ready((loss2, c2, r2))
    loss_r2, c_r2, r_r2 = _kto_ref(pc2, pr2, rc2, rr2, beta)
    assert jnp.allclose(loss2, loss_r2, atol=1e-4), (loss2, loss_r2)
    assert jnp.allclose(c2, c_r2, atol=1e-5)
    assert jnp.allclose(r2, r_r2, atol=1e-5)

    print("KERNEL_OK")
</pallas_src>

<mosaic_0001>
module attributes {stable_mosaic.version = 11 : i64} {
  func.func @_kto_kernel(%arg0: memref<8x128xf32, #tpu.memory_space<vmem>>, %arg1: memref<8x128xf32, #tpu.memory_space<vmem>>, %arg2: memref<8x128xf32, #tpu.memory_space<vmem>>, %arg3: memref<8x128xf32, #tpu.memory_space<vmem>>, %arg4: memref<1x1xf32, #tpu.memory_space<smem>>, %arg5: memref<8x128xf32, #tpu.memory_space<vmem>>, %arg6: memref<8x128xf32, #tpu.memory_space<vmem>>) attributes {dimension_semantics = [], scalar_prefetch = 0 : i64, scratch_operands = 0 : i64, tpu.core_type = #tpu.core_type<tc>} {
    %c0 = arith.constant 0 : index
    %c0_0 = arith.constant 0 : index
    %0 = vector.load %arg0[%c0, %c0_0] : memref<8x128xf32, #tpu.memory_space<vmem>>, vector<8x128xf32>
    %c0_1 = arith.constant 0 : index
    %c0_2 = arith.constant 0 : index
    %1 = vector.load %arg1[%c0_1, %c0_2] : memref<8x128xf32, #tpu.memory_space<vmem>>, vector<8x128xf32>
    %c0_3 = arith.constant 0 : index
    %c0_4 = arith.constant 0 : index
    %2 = vector.load %arg2[%c0_3, %c0_4] : memref<8x128xf32, #tpu.memory_space<vmem>>, vector<8x128xf32>
    %c0_5 = arith.constant 0 : index
    %c0_6 = arith.constant 0 : index
    %3 = vector.load %arg3[%c0_5, %c0_6] : memref<8x128xf32, #tpu.memory_space<vmem>>, vector<8x128xf32>
    %4 = arith.subf %0, %2 : vector<8x128xf32>
    %5 = arith.subf %1, %3 : vector<8x128xf32>
    %6 = vector.shape_cast %4 : vector<8x128xf32> to vector<1x8x128xf32>
    %cst = arith.constant dense<0.000000e+00> : vector<1xf32>
    %7 = vector.multi_reduction <add>, %6, %cst [1, 2] : vector<1x8x128xf32> to vector<1xf32>
    %8 = vector.shape_cast %7 : vector<1xf32> to vector<1x1x1xf32>
    %9 = vector.extract %8[0, 0, 0] : f32 from vector<1x1x1xf32>
    %cst_7 = arith.constant 1.250000e-01 : f32
    %10 = arith.mulf %9, %cst_7 : f32
    %cst_8 = arith.constant 0.000000e+00 : f32
    %11 = arith.maximumf %10, %cst_8 : f32
    %12 = vector.shape_cast %5 : vector<8x128xf32> to vector<1x8x128xf32>
    %cst_9 = arith.constant dense<0.000000e+00> : vector<1xf32>
    %13 = vector.multi_reduction <add>, %12, %cst_9 [1, 2] : vector<1x8x128xf32> to vector<1xf32>
    %14 = vector.shape_cast %13 : vector<1xf32> to vector<1x1x1xf32>
    %15 = vector.extract %14[0, 0, 0] : f32 from vector<1x1x1xf32>
    %cst_10 = arith.constant 1.250000e-01 : f32
    %16 = arith.mulf %15, %cst_10 : f32
    %cst_11 = arith.constant 0.000000e+00 : f32
    %17 = arith.maximumf %16, %cst_11 : f32
    %cst_12 = arith.constant 1.000000e-01 : f32
    %18 = vector.broadcast %cst_12 : f32 to vector<8x128xf32>
    %19 = arith.mulf %18, %4 : vector<8x128xf32>
    %cst_13 = arith.constant 1.000000e-01 : f32
    %20 = vector.broadcast %cst_13 : f32 to vector<8x128xf32>
    %21 = arith.mulf %20, %5 : vector<8x128xf32>
    %cst_14 = arith.constant 1.000000e-01 : f32
    %22 = arith.mulf %cst_14, %17 : f32
    %23 = vector.broadcast %22 : f32 to vector<8x128xf32>
    %24 = arith.subf %19, %23 : vector<8x128xf32>
    %cst_15 = arith.constant 5.000000e-01 : f32
    %25 = vector.broadcast %cst_15 : f32 to vector<8x128xf32>
    %26 = arith.mulf %25, %24 : vector<8x128xf32>
    %27 = math.tanh %26 : vector<8x128xf32>
    %cst_16 = arith.constant 1.000000e+00 : f32
    %28 = vector.broadcast %cst_16 : f32 to vector<8x128xf32>
    %29 = arith.subf %28, %27 : vector<8x128xf32>
    %cst_17 = arith.constant 5.000000e-01 : f32
    %30 = vector.broadcast %cst_17 : f32 to vector<8x128xf32>
    %31 = arith.mulf %30, %29 : vector<8x128xf32>
    %cst_18 = arith.constant 1.000000e-01 : f32
    %32 = arith.mulf %cst_18, %11 : f32
    %33 = vector.broadcast %32 : f32 to vector<8x128xf32>
    %34 = arith.subf %33, %21 : vector<8x128xf32>
    %cst_19 = arith.constant 5.000000e-01 : f32
    %35 = vector.broadcast %cst_19 : f32 to vector<8x128xf32>
    %36 = arith.mulf %35, %34 : vector<8x128xf32>
    %37 = math.tanh %36 : vector<8x128xf32>
    %cst_20 = arith.constant 1.000000e+00 : f32
    %38 = vector.broadcast %cst_20 : f32 to vector<8x128xf32>
    %39 = arith.subf %38, %37 : vector<8x128xf32>
    %cst_21 = arith.constant 5.000000e-01 : f32
    %40 = vector.broadcast %cst_21 : f32 to vector<8x128xf32>
    %41 = arith.mulf %40, %39 : vector<8x128xf32>
    %42 = tpu.iota {dimensions = array<i32: 0>} : vector<8x128xi32>
    %43 = tpu.iota {dimensions = array<i32: 1>} : vector<8x128xi32>
    %c128_i32 = arith.constant 128 : i32
    %44 = vector.broadcast %c128_i32 : i32 to vector<8x128xi32>
    %45 = arith.muli %42, %44 : vector<8x128xi32>
    %46 = arith.addi %45, %43 : vector<8x128xi32>
    %c8_i32 = arith.constant 8 : i32
    %47 = vector.broadcast %c8_i32 : i32 to vector<8x128xi32>
    %48 = arith.cmpi slt, %46, %47 : vector<8x128xi32>
    %cst_22 = arith.constant 0.000000e+00 : f32
    %49 = vector.broadcast %cst_22 : f32 to vector<8x128xf32>
    %50 = arith.select %48, %31, %49 : vector<8x128xi1>, vector<8x128xf32>
    %cst_23 = arith.constant 0.000000e+00 : f32
    %51 = vector.broadcast %cst_23 : f32 to vector<8x128xf32>
    %52 = arith.select %48, %41, %51 : vector<8x128xi1>, vector<8x128xf32>
    %53 = vector.shape_cast %50 : vector<8x128xf32> to vector<1x8x128xf32>
    %cst_24 = arith.constant dense<0.000000e+00> : vector<1xf32>
    %54 = vector.multi_reduction <add>, %53, %cst_24 [1, 2] : vector<1x8x128xf32> to vector<1xf32>
    %55 = vector.shape_cast %54 : vector<1xf32> to vector<1x1x1xf32>
    %56 = vector.extract %55[0, 0, 0] : f32 from vector<1x1x1xf32>
    %57 = vector.shape_cast %52 : vector<8x128xf32> to vector<1x8x128xf32>
    %cst_25 = arith.constant dense<0.000000e+00> : vector<1xf32>
    %58 = vector.multi_reduction <add>, %57, %cst_25 [1, 2] : vector<1x8x128xf32> to vector<1xf32>
    %59 = vector.shape_cast %58 : vector<1xf32> to vector<1x1x1xf32>
    %60 = vector.extract %59[0, 0, 0] : f32 from vector<1x1x1xf32>
    %61 = arith.addf %56, %60 : f32
    %cst_26 = arith.constant 6.250000e-02 : f32
    %62 = arith.mulf %61, %cst_26 : f32
    %c0_27 = arith.constant 0 : index
    %c0_28 = arith.constant 0 : index
    %63 = memref.load %arg4[%c0_27, %c0_28] : memref<1x1xf32, #tpu.memory_space<smem>>
    memref.store %62, %arg4[%c0_27, %c0_28] : memref<1x1xf32, #tpu.memory_space<smem>>
    %c0_29 = arith.constant 0 : index
    %c0_30 = arith.constant 0 : index
    %64 = vector.load %arg5[%c0_29, %c0_30] : memref<8x128xf32, #tpu.memory_space<vmem>>, vector<8x128xf32>
    tpu.vector_store %arg5[%c0_29, %c0_30], %19 {strides = array<i32>} : memref<8x128xf32, #tpu.memory_space<vmem>>, vector<8x128xf32>,
    %c0_31 = arith.constant 0 : index
    %c0_32 = arith.constant 0 : index
    %65 = vector.load %arg6[%c0_31, %c0_32] : memref<8x128xf32, #tpu.memory_space<vmem>>, vector<8x128xf32>
    tpu.vector_store %arg6[%c0_31, %c0_32], %21 {strides = array<i32>} : memref<8x128xf32, #tpu.memory_space<vmem>>, vector<8x128xf32>,
    return
  }
}

</mosaic_0001>

<llo_original>
// kernel: tpu_custom_call.1
$region0: #{tpu_custom_call.1}
  #allocation0 [shape = 'u32[]', space=smem, size = 0x4, offset = 0x4, fixed_abs, tag = 'smem constant byte address 0x4 - core index']
  #allocation1 [shape = 'u32[72,128]{1,0:T(1,128)}', space=vmem, size = 0x9000, scoped, tag = 'internal scratch']
  %s0 = inlined_call_operand.hbm [shape: f32[8,128], index: 0, kind: input, shape index: {}]
  %s1 = inlined_call_operand.hbm [shape: f32[8,128], index: 1, kind: input, shape index: {}]
  %s2 = inlined_call_operand.hbm [shape: f32[8,128], index: 2, kind: input, shape index: {}]
  %s3 = inlined_call_operand.hbm [shape: f32[8,128], index: 3, kind: input, shape index: {}]
  %s4 = inlined_call_operand.hbm [shape: f32[1,1], index: 4, kind: output, shape index: {0}]
  %s5 = inlined_call_operand.hbm [shape: f32[8,128], index: 5, kind: output, shape index: {1}]
  %s6 = inlined_call_operand.hbm [shape: f32[8,128], index: 6, kind: output, shape index: {2}]
  %7 = xla_tuple %s4, %s5, %s6
  %s8 = sld [smem:[#allocation0]]
  $region58: #{tpu_custom_call.1} parent=0
    _
  %s10 = ssub.s32 1, %s8
  %s11 = scalar_select 0, %s10, %s8
  $region1: #{tpu_custom_call.1} parent=0
    #allocation2 [shape = 'u8[4096]{0}', space=vmem, size = 0x1000, scoped, tag = 'input window, operand 0, single buffered']
    #allocation3 [shape = 's32[1]{0}', space=sflag, size = 0x4, scoped, tag = 'scoped memory for tpu_custom_call.1']
    #allocation4 [shape = 's32[1]{0}', space=sflag, size = 0x4, scoped, tag = 'scoped memory for tpu_custom_call.1']
    #allocation5 [shape = 's32[1]{0}', space=sflag, size = 0x4, scoped, tag = 'scoped memory for tpu_custom_call.1']
    #allocation6 [shape = 'u8[4096]{0}', space=vmem, size = 0x1000, scoped, tag = 'input window, operand 1, single buffered']
    #allocation7 [shape = 's32[1]{0}', space=sflag, size = 0x4, scoped, tag = 'scoped memory for tpu_custom_call.1']
    #allocation8 [shape = 'u8[4096]{0}', space=vmem, size = 0x1000, scoped, tag = 'input window, operand 2, single buffered']
    #allocation9 [shape = 'u8[4096]{0}', space=vmem, size = 0x1000, scoped, tag = 'input window, operand 3, single buffered']
    #allocation10 [shape = 's32[1]{0}', space=sflag, size = 0x4, scoped, tag = 'scoped memory for tpu_custom_call.1']
    #allocation11 [shape = 'u8[512]{0}', space=smem, size = 0x200, scoped, tag = 'output window, operand 0, single buffered']
    #allocation12 [shape = 'u8[4096]{0}', space=vmem, size = 0x1000, scoped, tag = 'output window, operand 1, single buffered']
    #allocation13 [shape = 'u8[4096]{0}', space=vmem, size = 0x1000, scoped, tag = 'output window, operand 2, single buffered']
    #allocation14 [shape = 's32[1]{0}', space=sflag, size = 0x4, scoped, tag = 'scoped memory for tpu_custom_call.1']
    %12 = vsyncpa [#allocation3], 0
    %13 = vsyncpa [#allocation7], 0
    %14 = vsyncpa [#allocation10], 0
    %15 = vsyncpa [#allocation5], 0
    %16 = vsyncpa [#allocation4], 0
    %17 = vsyncpa [#allocation14], 0
    // Predicated region
    $region2: #{tpu_custom_call.1} parent=1 // pred_check
      _
    $region3: #{tpu_custom_call.1} parent=1 // pred_check_branch
      %19 = sbr.rel (0) target = $region5
    $region4: #{tpu_custom_call.1} parent=1 // pred_region
      %21 = vsyncadd [#allocation3], 0
      %s23 = sshll.u32 %s0, 4
      %s24 = int_to_ptr.hbm [resolvable:$true] %s23
      %s25 = sshll.u32 [#allocation2], 4
      %s26 = int_to_ptr.vmem [resolvable:$true] %s25
      %28 = dma.hbm_to_vmem [thread:$0]  %s24, 128, %s26, [#allocation3]
    $region5: #{tpu_custom_call.1} parent=1 // pred_fallthru
      _
    // Predicated region
    $region6: #{tpu_custom_call.1} parent=1 // pred_check
      _
    $region7: #{tpu_custom_call.1} parent=1 // pred_check_branch
      %30 = sbr.rel (0) target = $region9
    $region8: #{tpu_custom_call.1} parent=1 // pred_region
      %32 = vsyncadd [#allocation7], 0
      %s34 = sshll.u32 %s1, 4
      %s35 = int_to_ptr.hbm [resolvable:$true] %s34
      %s36 = sshll.u32 [#allocation6], 4
      %s37 = int_to_ptr.vmem [resolvable:$true] %s36
      %39 = dma.hbm_to_vmem [thread:$0]  %s35, 128, %s37, [#allocation7]
    $region9: #{tpu_custom_call.1} parent=1 // pred_fallthru
      _
    // Predicated region
    $region10: #{tpu_custom_call.1} parent=1 // pred_check
      _
    $region11: #{tpu_custom_call.1} parent=1 // pred_check_branch
      %41 = sbr.rel (0) target = $region13
    $region12: #{tpu_custom_call.1} parent=1 // pred_region
      %43 = vsyncadd [#allocation7], 0
      %s45 = sshll.u32 %s2, 4
      %s46 = int_to_ptr.hbm [resolvable:$true] %s45
      %s47 = sshll.u32 [#allocation8], 4
      %s48 = int_to_ptr.vmem [resolvable:$true] %s47
      %50 = dma.hbm_to_vmem [thread:$0]  %s46, 128, %s48, [#allocation7]
    $region13: #{tpu_custom_call.1} parent=1 // pred_fallthru
      _
    // Predicated region
    $region14: #{tpu_custom_call.1} parent=1 // pred_check
      _
    $region15: #{tpu_custom_call.1} parent=1 // pred_check_branch
      %52 = sbr.rel (0) target = $region17
    $region16: #{tpu_custom_call.1} parent=1 // pred_region
      %54 = vsyncadd [#allocation10], 0
      %s56 = sshll.u32 %s3, 4
      %s57 = int_to_ptr.hbm [resolvable:$true] %s56
      %s58 = sshll.u32 [#allocation9], 4
      %s59 = int_to_ptr.vmem [resolvable:$true] %s58
      %61 = dma.hbm_to_vmem [thread:$0]  %s57, 128, %s59, [#allocation10]
    $region17: #{tpu_custom_call.1} parent=1 // pred_fallthru
      _
    // Predicated region
    $region18: #{tpu_custom_call.1} parent=1 // pred_check
      _
    $region19: #{tpu_custom_call.1} parent=1 // pred_check_branch
      %63 = sbr.rel (0) target = $region21
    $region20: #{tpu_custom_call.1} parent=1 // pred_region
      %65 = dma.done [#allocation3], 128
    $region21: #{tpu_custom_call.1} parent=1 // pred_fallthru
      _
    // Predicated region
    $region22: #{tpu_custom_call.1} parent=1 // pred_check
      _
    $region23: #{tpu_custom_call.1} parent=1 // pred_check_branch
      %67 = sbr.rel (0) target = $region25
    $region24: #{tpu_custom_call.1} parent=1 // pred_region
      %69 = dma.done [#allocation7], 128
    $region25: #{tpu_custom_call.1} parent=1 // pred_fallthru
      _
    // Predicated region
    $region26: #{tpu_custom_call.1} parent=1 // pred_check
      _
    $region27: #{tpu_custom_call.1} parent=1 // pred_check_branch
      %71 = sbr.rel (0) target = $region29
    $region28: #{tpu_custom_call.1} parent=1 // pred_region
      %73 = dma.done [#allocation7], 128
    $region29: #{tpu_custom_call.1} parent=1 // pred_fallthru
      _
    // Predicated region
    $region30: #{tpu_custom_call.1} parent=1 // pred_check
      _
    $region31: #{tpu_custom_call.1} parent=1 // pred_check_branch
      %75 = sbr.rel (0) target = $region33
    $region32: #{tpu_custom_call.1} parent=1 // pred_region
      %77 = dma.done [#allocation10], 128
    $region33: #{tpu_custom_call.1} parent=1 // pred_fallthru
      _
    %v78 = vld [vmem:[#allocation2] sm:$0xff]
    %v79 = vld [vmem:[#allocation6] sm:$0xff]
    %v80 = vld [vmem:[#allocation8] sm:$0xff]
    %v81 = vld [vmem:[#allocation9] sm:$0xff]
    %v82 = vsub.f32 %v78, %v80
    %v83 = vsub.f32 %v79, %v81
    %84 = vadd.xlane.f32.xlu0 %v82
    %v85 = vpop.xlane.xlu0 %84
    %v86 = vrot.slane %v85, 4
    %v87 = vadd.f32 %v85, %v86
    %v88 = vrot.slane %v87, 2
    %v89 = vadd.f32 %v87, %v88
    %v90 = vrot.slane %v89, 1
    %v91 = vadd.f32 %v89, %v90
    %s92 = vtos %v91
    %s93 = smul.f32 %s92, 0.125
    %s94 = smax.f32 %s93, 0.0
    %95 = vadd.xlane.f32.xlu0 %v83
    %v96 = vpop.xlane.xlu0 %95
    %v97 = vrot.slane %v96, 4
    %v98 = vadd.f32 %v96, %v97
    %v99 = vrot.slane %v98, 2
    %v100 = vadd.f32 %v98, %v99
    %v101 = vrot.slane %v100, 1
    %v102 = vadd.f32 %v100, %v101
    %s103 = vtos %v102
    %s104 = smul.f32 %s103, 0.125
    %s105 = smax.f32 %s104, 0.0
    %v106 = vmul.f32 %v82, 0.1
    %v107 = vmul.f32 %v83, 0.1
    %s108 = smul.f32 %s105, 0.1
    %v109 = vstv %s108
    %v110 = vsub.f32 %v106, %v109
    %v111 = vmul.f32 %v110, 0.5
    %v112 = vtanh.pop %v111
    %v113 = vsub.f32 1.0, %v112
    %v114 = vmul.f32 %v113, 0.5
    %s115 = smul.f32 %s94, 0.1
    %v116 = vstv %s115
    %v117 = vsub.f32 %v116, %v107
    %v118 = vmul.f32 %v117, 0.5
    %v119 = vtanh.pop %v118
    %v120 = vsub.f32 1.0, %v119
    %v121 = vmul.f32 %v120, 0.5
    %v122 = vlaneseq
    %v123 = vshrl.u32 %v122, 7
    %v124 = vlaneseq
    %v125 = vand.u32 %v124, 127
    %v126 = vmul.u32 %v123, 128
    %v127 = vadd.s32 %v126, %v125
    %vm128 = vcmp.lt.s32.totalorder %v127, 8
    %v129 = vsel %vm128, %v114, 0.0
    %v130 = vsel %vm128, %v121, 0.0
    %131 = vadd.xlane.f32.xlu0 %v129
    %v132 = vpop.xlane.xlu0 %131
    %v133 = vrot.slane %v132, 4
    %v134 = vadd.f32 %v132, %v133
    %v135 = vrot.slane %v134, 2
    %v136 = vadd.f32 %v134, %v135
    %v137 = vrot.slane %v136, 1
    %v138 = vadd.f32 %v136, %v137
    %s139 = vtos %v138
    %140 = vadd.xlane.f32.xlu0 %v130
    %v141 = vpop.xlane.xlu0 %140
    %v142 = vrot.slane %v141, 4
    %v143 = vadd.f32 %v141, %v142
    %v144 = vrot.slane %v143, 2
    %v145 = vadd.f32 %v143, %v144
    %v146 = vrot.slane %v145, 1
    %v147 = vadd.f32 %v145, %v146
    %s148 = vtos %v147
    %s149 = sadd.f32 %s139, %s148
    %s150 = smul.f32 %s149, 0.0625
    %s151 = scalar_lea.smem [#allocation11], 0
    %152 = sst [smem:[%s151]] %s150
    %153 = vst [vmem:[#allocation12] sm:$0xff] %v106
    %154 = vst [vmem:[#allocation13] sm:$0xff] %v107
    // Predicated region
    $region34: #{tpu_custom_call.1} parent=1 // pred_check
      _
    $region35: #{tpu_custom_call.1} parent=1 // pred_check_branch
      %156 = sbr.rel (0) target = $region37
    $region36: #{tpu_custom_call.1} parent=1 // pred_region
      %158 = vsyncadd [#allocation5], 0
      %s160 = sshll.u32 %s4, 4
      %s161 = int_to_ptr.hbm [resolvable:$true] %s160
      %163 = dma.smem_to_hbm [#allocation11], 16, %s161, [#allocation5]
    $region37: #{tpu_custom_call.1} parent=1 // pred_fallthru
      _
    // Predicated region
    $region38: #{tpu_custom_call.1} parent=1 // pred_check
      _
    $region39: #{tpu_custom_call.1} parent=1 // pred_check_branch
      %165 = sbr.rel (0) target = $region41
    $region40: #{tpu_custom_call.1} parent=1 // pred_region
      %167 = vsyncadd [#allocation4], 0
      %s169 = sshll.u32 [#allocation12], 4
      %s170 = int_to_ptr.vmem [resolvable:$true] %s169
      %s171 = sshll.u32 %s5, 4
      %s172 = int_to_ptr.hbm [resolvable:$true] %s171
      %174 = dma.vmem_to_hbm [thread:$0]  %s170, 128, %s172, [#allocation4]
    $region41: #{tpu_custom_call.1} parent=1 // pred_fallthru
      _
    // Predicated region
    $region42: #{tpu_custom_call.1} parent=1 // pred_check
      _
    $region43: #{tpu_custom_call.1} parent=1 // pred_check_branch
      %176 = sbr.rel (0) target = $region45
    $region44: #{tpu_custom_call.1} parent=1 // pred_region
      %178 = vsyncadd [#allocation14], 0
      %s180 = sshll.u32 [#allocation13], 4
      %s181 = int_to_ptr.vmem [resolvable:$true] %s180
      %s182 = sshll.u32 %s6, 4
      %s183 = int_to_ptr.hbm [resolvable:$true] %s182
      %185 = dma.vmem_to_hbm [thread:$0]  %s181, 128, %s183, [#allocation14]
    $region45: #{tpu_custom_call.1} parent=1 // pred_fallthru
      _
    // Predicated region
    $region46: #{tpu_custom_call.1} parent=1 // pred_check
      _
    $region47: #{tpu_custom_call.1} parent=1 // pred_check_branch
      %187 = sbr.rel (0) target = $region49
    $region48: #{tpu_custom_call.1} parent=1 // pred_region
      %189 = dma.done [#allocation5], 16
    $region49: #{tpu_custom_call.1} parent=1 // pred_fallthru
      _
    // Predicated region
    $region50: #{tpu_custom_call.1} parent=1 // pred_check
      _
    $region51: #{tpu_custom_call.1} parent=1 // pred_check_branch
      %191 = sbr.rel (0) target = $region53
    $region52: #{tpu_custom_call.1} parent=1 // pred_region
      %193 = dma.done [#allocation4], 128
    $region53: #{tpu_custom_call.1} parent=1 // pred_fallthru
      _
    // Predicated region
    $region54: #{tpu_custom_call.1} parent=1 // pred_check
      _
    $region55: #{tpu_custom_call.1} parent=1 // pred_check_branch
      %195 = sbr.rel (0) target = $region57
    $region56: #{tpu_custom_call.1} parent=1 // pred_region
      %197 = dma.done [#allocation14], 128
    $region57: #{tpu_custom_call.1} parent=1 // pred_fallthru
      _
    %198 = sfence
    %199 = vsyncpa [#allocation3], 1
    %200 = vsyncpa [#allocation7], 1
    %201 = vsyncpa [#allocation10], 1
    %202 = vsyncpa [#allocation4], 1
    %203 = vsyncpa [#allocation14], 1
    %204 = vsyncpa [#allocation5], 1

</llo_original>
